<compile_context>
chip_gen: v7x
topology: tpu7x:2x2x1
jax: 0.10.0
libtpu: 0.0.40
codegen_flags: <defaults>
</compile_context>

<pallas_src>
import jax
import jax.numpy as jnp
from jax.experimental import pallas as pl
from jax.experimental.pallas import tpu as pltpu


def _interp_matrix(out_size: int, in_size: int) -> jnp.ndarray:
    """Build (out_size, in_size) bilinear weight matrix matching
    torch.nn.functional.interpolate(mode='bilinear', align_corners=False)."""
    scale = in_size / out_size
    dst = jnp.arange(out_size, dtype=jnp.float32)
    src = jnp.maximum(scale * (dst + 0.5) - 0.5, 0.0)
    i0 = jnp.clip(jnp.floor(src).astype(jnp.int32), 0, in_size - 1)
    i1 = jnp.minimum(i0 + 1, in_size - 1)
    w1 = src - i0.astype(jnp.float32)
    w0 = 1.0 - w1
    rows = jnp.arange(out_size)
    mat = jnp.zeros((out_size, in_size), jnp.float32)
    mat = mat.at[rows, i0].add(w0)
    mat = mat.at[rows, i1].add(w1)
    return mat


def _make_fused_kernel(num_scales: int):
    """Kernel computing the mean of all K flow maps for one batch element."""
    inv_k = 1.0 / num_scales

    def kernel(*refs):
        hv_refs = refs[:num_scales]
        wh_refs = refs[num_scales:2 * num_scales]
        wwt_refs = refs[2 * num_scales:3 * num_scales]
        out_ref = refs[3 * num_scales]

        acc = None
        for hv_ref, wh_ref, wwt_ref in zip(hv_refs, wh_refs, wwt_refs):
            # (C, H_in, W_in): DMA'd in native dtype, cast in-kernel.
            hv = hv_ref[0].astype(jnp.float32)
            log_prob = jnp.mean(hv * hv, axis=0) * (-0.5)       # (H_in, W_in)
            neg_prob = -jnp.exp(log_prob)                       # (H_in, W_in)
            tmp = jnp.dot(wh_ref[...], neg_prob,
                          preferred_element_type=jnp.float32)   # (H_out, W_in)
            fm = jnp.dot(tmp, wwt_ref[...],
                         preferred_element_type=jnp.float32)    # (H_out, W_out)
            acc = fm if acc is None else acc + fm
        out_ref[0, 0] = acc * inv_k                              # mean over scales

    return kernel


def anomaly_map_generator(hidden_variables, input_size):
    """JAX/Pallas equivalent of AnomalyMapGenerator.forward (single fused call)."""
    hout, wout = input_size
    n = hidden_variables[0].shape[0]
    k = len(hidden_variables)

    # Precomputed (deterministic) interpolation weight matrices per scale.
    whs = [_interp_matrix(hout, hv.shape[2]) for hv in hidden_variables]
    wwts = [_interp_matrix(wout, hv.shape[3]).T for hv in hidden_variables]

    in_specs = []
    for hv in hidden_variables:
        _, c, hin, win = hv.shape
        in_specs.append(pl.BlockSpec((1, c, hin, win), lambda i: (i, 0, 0, 0)))
    for wh in whs:
        in_specs.append(pl.BlockSpec(wh.shape, lambda i: (0, 0)))
    for wwt in wwts:
        in_specs.append(pl.BlockSpec(wwt.shape, lambda i: (0, 0)))

    kernel = _make_fused_kernel(k)

    return pl.pallas_call(
        kernel,
        out_shape=jax.ShapeDtypeStruct((n, 1, hout, wout), jnp.float32),
        grid=(n,),
        in_specs=in_specs,
        out_specs=pl.BlockSpec((1, 1, hout, wout), lambda i: (i, 0, 0, 0)),
        compiler_params=pltpu.CompilerParams(
            dimension_semantics=("parallel",),
            vmem_limit_bytes=32 * 1024 * 1024,
        ),
    )(*hidden_variables, *whs, *wwts)


if __name__ == "__main__":
    key = jax.random.PRNGKey(0)
    k1, k2, k3 = jax.random.split(key, 3)
    input_size = (16, 16)
    # Hidden variables from three NF FastFlow blocks (different spatial scales).
    hidden_variables = [
        jax.random.normal(k1, (2, 4, 16, 16), jnp.float32),
        jax.random.normal(k2, (2, 8, 8, 8), jnp.float32),
        jax.random.normal(k3, (2, 16, 4, 4), jnp.float32),
    ]
    anomaly_map = anomaly_map_generator(hidden_variables, input_size)
    jax.block_until_ready(anomaly_map)
    assert anomaly_map.shape == (2, 1, 16, 16), anomaly_map.shape
    assert bool(jnp.all(jnp.isfinite(anomaly_map)))
    print("KERNEL_OK")
</pallas_src>

<mosaic_0001>
module attributes {stable_mosaic.version = 11 : i64} {
  func.func @kernel(%arg0: i32, %arg1: memref<1x4x16x16xf32, #tpu.memory_space<vmem>>, %arg2: memref<1x8x8x8xf32, #tpu.memory_space<vmem>>, %arg3: memref<1x16x4x4xf32, #tpu.memory_space<vmem>>, %arg4: memref<16x16xf32, #tpu.memory_space<vmem>>, %arg5: memref<16x8xf32, #tpu.memory_space<vmem>>, %arg6: memref<16x4xf32, #tpu.memory_space<vmem>>, %arg7: memref<16x16xf32, #tpu.memory_space<vmem>>, %arg8: memref<8x16xf32, #tpu.memory_space<vmem>>, %arg9: memref<4x16xf32, #tpu.memory_space<vmem>>, %arg10: memref<1x1x16x16xf32, #tpu.memory_space<vmem>>) attributes {dimension_semantics = [#tpu.dimension_semantics<parallel>], iteration_bounds = array<i64: 2>, scalar_prefetch = 0 : i64, scratch_operands = 0 : i64, tpu.core_type = #tpu.core_type<tc>, window_params = [{transform_indices = @transform_0, window_bounds = array<i64: 1, 4, 16, 16>}, {transform_indices = @transform_1, window_bounds = array<i64: 1, 8, 8, 8>}, {transform_indices = @transform_2, window_bounds = array<i64: 1, 16, 4, 4>}, {pipeline_mode = #tpu.pipeline_mode<synchronous>, transform_indices = @transform_3, window_bounds = array<i64: 16, 16>}, {pipeline_mode = #tpu.pipeline_mode<synchronous>, transform_indices = @transform_4, window_bounds = array<i64: 16, 8>}, {pipeline_mode = #tpu.pipeline_mode<synchronous>, transform_indices = @transform_5, window_bounds = array<i64: 16, 4>}, {pipeline_mode = #tpu.pipeline_mode<synchronous>, transform_indices = @transform_6, window_bounds = array<i64: 16, 16>}, {pipeline_mode = #tpu.pipeline_mode<synchronous>, transform_indices = @transform_7, window_bounds = array<i64: 8, 16>}, {pipeline_mode = #tpu.pipeline_mode<synchronous>, transform_indices = @transform_8, window_bounds = array<i64: 4, 16>}, {transform_indices = @transform_9, window_bounds = array<i64: 1, 1, 16, 16>}]} {
    %c0 = arith.constant 0 : index
    %c0_0 = arith.constant 0 : index
    %c0_1 = arith.constant 0 : index
    %c0_2 = arith.constant 0 : index
    %0 = vector.load %arg1[%c0, %c0_0, %c0_1, %c0_2] : memref<1x4x16x16xf32, #tpu.memory_space<vmem>>, vector<1x4x16x16xf32>
    %1 = vector.shape_cast %0 : vector<1x4x16x16xf32> to vector<4x16x16xf32>
    %2 = arith.mulf %1, %1 : vector<4x16x16xf32>
    %cst = arith.constant dense<0.000000e+00> : vector<16x16xf32>
    %3 = vector.multi_reduction <add>, %2, %cst [0] : vector<4x16x16xf32> to vector<16x16xf32>
    %cst_3 = arith.constant 4.000000e+00 : f32
    %4 = vector.broadcast %cst_3 : f32 to vector<16x16xf32>
    %5 = arith.divf %3, %4 : vector<16x16xf32>
    %cst_4 = arith.constant -5.000000e-01 : f32
    %6 = vector.broadcast %cst_4 : f32 to vector<16x16xf32>
    %7 = arith.mulf %5, %6 : vector<16x16xf32>
    %8 = math.exp %7 : vector<16x16xf32>
    %cst_5 = arith.constant 0.000000e+00 : f32
    %9 = vector.broadcast %cst_5 : f32 to vector<16x16xf32>
    %10 = arith.subf %9, %8 : vector<16x16xf32>
    %c0_6 = arith.constant 0 : index
    %c0_7 = arith.constant 0 : index
    %11 = vector.load %arg4[%c0_6, %c0_7] : memref<16x16xf32, #tpu.memory_space<vmem>>, vector<16x16xf32>
    %cst_8 = arith.constant dense<0.000000e+00> : vector<16x16xf32>
    %12 = tpu.matmul %11, %10, %cst_8 {dimension_numbers = #tpu.dot_dimension_numbers<[1], [0], [0], [1], [0, 0, 1, 1], [], []>} : vector<16x16xf32>, vector<16x16xf32>, vector<16x16xf32> -> vector<16x16xf32>
    %c0_9 = arith.constant 0 : index
    %c0_10 = arith.constant 0 : index
    %13 = vector.load %arg7[%c0_9, %c0_10] : memref<16x16xf32, #tpu.memory_space<vmem>>, vector<16x16xf32>
    %cst_11 = arith.constant dense<0.000000e+00> : vector<16x16xf32>
    %14 = tpu.matmul %12, %13, %cst_11 {dimension_numbers = #tpu.dot_dimension_numbers<[1], [0], [0], [1], [0, 0, 1, 1], [], []>} : vector<16x16xf32>, vector<16x16xf32>, vector<16x16xf32> -> vector<16x16xf32>
    %c0_12 = arith.constant 0 : index
    %c0_13 = arith.constant 0 : index
    %c0_14 = arith.constant 0 : index
    %c0_15 = arith.constant 0 : index
    %15 = vector.load %arg2[%c0_12, %c0_13, %c0_14, %c0_15] : memref<1x8x8x8xf32, #tpu.memory_space<vmem>>, vector<1x8x8x8xf32>
    %16 = vector.shape_cast %15 : vector<1x8x8x8xf32> to vector<8x8x8xf32>
    %17 = arith.mulf %16, %16 : vector<8x8x8xf32>
    %cst_16 = arith.constant dense<0.000000e+00> : vector<8x8xf32>
    %18 = vector.multi_reduction <add>, %17, %cst_16 [0] : vector<8x8x8xf32> to vector<8x8xf32>
    %cst_17 = arith.constant 8.000000e+00 : f32
    %19 = vector.broadcast %cst_17 : f32 to vector<8x8xf32>
    %20 = arith.divf %18, %19 : vector<8x8xf32>
    %cst_18 = arith.constant -5.000000e-01 : f32
    %21 = vector.broadcast %cst_18 : f32 to vector<8x8xf32>
    %22 = arith.mulf %20, %21 : vector<8x8xf32>
    %23 = math.exp %22 : vector<8x8xf32>
    %cst_19 = arith.constant 0.000000e+00 : f32
    %24 = vector.broadcast %cst_19 : f32 to vector<8x8xf32>
    %25 = arith.subf %24, %23 : vector<8x8xf32>
    %c0_20 = arith.constant 0 : index
    %c0_21 = arith.constant 0 : index
    %26 = vector.load %arg5[%c0_20, %c0_21] : memref<16x8xf32, #tpu.memory_space<vmem>>, vector<16x8xf32>
    %cst_22 = arith.constant dense<0.000000e+00> : vector<16x8xf32>
    %27 = tpu.matmul %26, %25, %cst_22 {dimension_numbers = #tpu.dot_dimension_numbers<[1], [0], [0], [1], [0, 0, 1, 1], [], []>} : vector<16x8xf32>, vector<8x8xf32>, vector<16x8xf32> -> vector<16x8xf32>
    %c0_23 = arith.constant 0 : index
    %c0_24 = arith.constant 0 : index
    %28 = vector.load %arg8[%c0_23, %c0_24] : memref<8x16xf32, #tpu.memory_space<vmem>>, vector<8x16xf32>
    %cst_25 = arith.constant dense<0.000000e+00> : vector<16x16xf32>
    %29 = tpu.matmul %27, %28, %cst_25 {dimension_numbers = #tpu.dot_dimension_numbers<[1], [0], [0], [1], [0, 0, 1, 1], [], []>} : vector<16x8xf32>, vector<8x16xf32>, vector<16x16xf32> -> vector<16x16xf32>
    %30 = arith.addf %14, %29 : vector<16x16xf32>
    %c0_26 = arith.constant 0 : index
    %c0_27 = arith.constant 0 : index
    %c0_28 = arith.constant 0 : index
    %c0_29 = arith.constant 0 : index
    %31 = vector.load %arg3[%c0_26, %c0_27, %c0_28, %c0_29] : memref<1x16x4x4xf32, #tpu.memory_space<vmem>>, vector<1x16x4x4xf32>
    %32 = vector.shape_cast %31 : vector<1x16x4x4xf32> to vector<16x4x4xf32>
    %33 = arith.mulf %32, %32 : vector<16x4x4xf32>
    %cst_30 = arith.constant dense<0.000000e+00> : vector<4x4xf32>
    %34 = vector.multi_reduction <add>, %33, %cst_30 [0] : vector<16x4x4xf32> to vector<4x4xf32>
    %cst_31 = arith.constant 1.600000e+01 : f32
    %35 = vector.broadcast %cst_31 : f32 to vector<4x4xf32>
    %36 = arith.divf %34, %35 : vector<4x4xf32>
    %cst_32 = arith.constant -5.000000e-01 : f32
    %37 = vector.broadcast %cst_32 : f32 to vector<4x4xf32>
    %38 = arith.mulf %36, %37 : vector<4x4xf32>
    %39 = math.exp %38 : vector<4x4xf32>
    %cst_33 = arith.constant 0.000000e+00 : f32
    %40 = vector.broadcast %cst_33 : f32 to vector<4x4xf32>
    %41 = arith.subf %40, %39 : vector<4x4xf32>
    %c0_34 = arith.constant 0 : index
    %c0_35 = arith.constant 0 : index
    %42 = vector.load %arg6[%c0_34, %c0_35] : memref<16x4xf32, #tpu.memory_space<vmem>>, vector<16x4xf32>
    %cst_36 = arith.constant dense<0.000000e+00> : vector<16x4xf32>
    %43 = tpu.matmul %42, %41, %cst_36 {dimension_numbers = #tpu.dot_dimension_numbers<[1], [0], [0], [1], [0, 0, 1, 1], [], []>} : vector<16x4xf32>, vector<4x4xf32>, vector<16x4xf32> -> vector<16x4xf32>
    %c0_37 = arith.constant 0 : index
    %c0_38 = arith.constant 0 : index
    %44 = vector.load %arg9[%c0_37, %c0_38] : memref<4x16xf32, #tpu.memory_space<vmem>>, vector<4x16xf32>
    %cst_39 = arith.constant dense<0.000000e+00> : vector<16x16xf32>
    %45 = tpu.matmul %43, %44, %cst_39 {dimension_numbers = #tpu.dot_dimension_numbers<[1], [0], [0], [1], [0, 0, 1, 1], [], []>} : vector<16x4xf32>, vector<4x16xf32>, vector<16x16xf32> -> vector<16x16xf32>
    %46 = arith.addf %30, %45 : vector<16x16xf32>
    %cst_40 = arith.constant 0.333333343 : f32
    %47 = vector.broadcast %cst_40 : f32 to vector<16x16xf32>
    %48 = arith.mulf %46, %47 : vector<16x16xf32>
    %c0_41 = arith.constant 0 : index
    %c0_42 = arith.constant 0 : index
    %c0_43 = arith.constant 0 : index
    %c0_44 = arith.constant 0 : index
    %49 = vector.load %arg10[%c0_41, %c0_42, %c0_43, %c0_44] : memref<1x1x16x16xf32, #tpu.memory_space<vmem>>, vector<1x1x16x16xf32>
    %50 = vector.shape_cast %49 : vector<1x1x16x16xf32> to vector<16x16xf32>
    %51 = vector.shape_cast %48 : vector<16x16xf32> to vector<1x1x16x16xf32>
    tpu.vector_store %arg10[%c0_41, %c0_42, %c0_43, %c0_44], %51 {strides = array<i32>} : memref<1x1x16x16xf32, #tpu.memory_space<vmem>>, vector<1x1x16x16xf32>,
    return
  }
  func.func @transform_0(%arg0: i32) -> (i32, i32, i32, i32) {
    %c0_i32 = arith.constant 0 : i32
    %c0_i32_0 = arith.constant 0 : i32
    %c0_i32_1 = arith.constant 0 : i32
    %c0_i32_2 = arith.constant 0 : i32
    return %arg0, %c0_i32, %c0_i32_0, %c0_i32_1 : i32, i32, i32, i32
  }
  func.func @transform_1(%arg0: i32) -> (i32, i32, i32, i32) {
    %c0_i32 = arith.constant 0 : i32
    %c0_i32_0 = arith.constant 0 : i32
    %c0_i32_1 = arith.constant 0 : i32
    %c0_i32_2 = arith.constant 0 : i32
    return %arg0, %c0_i32, %c0_i32_0, %c0_i32_1 : i32, i32, i32, i32
  }
  func.func @transform_2(%arg0: i32) -> (i32, i32, i32, i32) {
    %c0_i32 = arith.constant 0 : i32
    %c0_i32_0 = arith.constant 0 : i32
    %c0_i32_1 = arith.constant 0 : i32
    %c0_i32_2 = arith.constant 0 : i32
    return %arg0, %c0_i32, %c0_i32_0, %c0_i32_1 : i32, i32, i32, i32
  }
  func.func @transform_3(%arg0: i32) -> (i32, i32) {
    %c0_i32 = arith.constant 0 : i32
    %c0_i32_0 = arith.constant 0 : i32
    %c0_i32_1 = arith.constant 0 : i32
    return %c0_i32, %c0_i32_0 : i32, i32
  }
  func.func @transform_4(%arg0: i32) -> (i32, i32) {
    %c0_i32 = arith.constant 0 : i32
    %c0_i32_0 = arith.constant 0 : i32
    %c0_i32_1 = arith.constant 0 : i32
    return %c0_i32, %c0_i32_0 : i32, i32
  }
  func.func @transform_5(%arg0: i32) -> (i32, i32) {
    %c0_i32 = arith.constant 0 : i32
    %c0_i32_0 = arith.constant 0 : i32
    %c0_i32_1 = arith.constant 0 : i32
    return %c0_i32, %c0_i32_0 : i32, i32
  }
  func.func @transform_6(%arg0: i32) -> (i32, i32) {
    %c0_i32 = arith.constant 0 : i32
    %c0_i32_0 = arith.constant 0 : i32
    %c0_i32_1 = arith.constant 0 : i32
    return %c0_i32, %c0_i32_0 : i32, i32
  }
  func.func @transform_7(%arg0: i32) -> (i32, i32) {
    %c0_i32 = arith.constant 0 : i32
    %c0_i32_0 = arith.constant 0 : i32
    %c0_i32_1 = arith.constant 0 : i32
    return %c0_i32, %c0_i32_0 : i32, i32
  }
  func.func @transform_8(%arg0: i32) -> (i32, i32) {
    %c0_i32 = arith.constant 0 : i32
    %c0_i32_0 = arith.constant 0 : i32
    %c0_i32_1 = arith.constant 0 : i32
    return %c0_i32, %c0_i32_0 : i32, i32
  }
  func.func @transform_9(%arg0: i32) -> (i32, i32, i32, i32) {
    %c0_i32 = arith.constant 0 : i32
    %c0_i32_0 = arith.constant 0 : i32
    %c0_i32_1 = arith.constant 0 : i32
    %c0_i32_2 = arith.constant 0 : i32
    return %arg0, %c0_i32, %c0_i32_0, %c0_i32_1 : i32, i32, i32, i32
  }
}

</mosaic_0001>

<llo_original>
// kernel: tpu_custom_call.1
$region0: #{tpu_custom_call.1}
  #allocation0 [shape = 'u32[]', space=smem, size = 0x4, offset = 0x4, fixed_abs, tag = 'smem constant byte address 0x4 - core index']
  #allocation1 [shape = 'u32[144,128]{1,0:T(1,128)}', space=vmem, size = 0x12000, scoped, tag = 'internal scratch']
  %s0 = inlined_call_operand.vmem [shape: f32[2,4,16,16], index: 0, kind: input, shape index: {}]
  %s1 = inlined_call_operand.hbm [shape: f32[2,8,8,8], index: 1, kind: input, shape index: {}]
  %s2 = inlined_call_operand.vmem [shape: f32[2,16,4,4], index: 2, kind: input, shape index: {}]
  %s3 = inlined_call_operand.vmem [shape: f32[16,16], index: 3, kind: input, shape index: {}]
  %s4 = inlined_call_operand.vmem [shape: f32[16,8], index: 4, kind: input, shape index: {}]
  %s5 = inlined_call_operand.vmem [shape: f32[16,4], index: 5, kind: input, shape index: {}]
  %s6 = inlined_call_operand.vmem [shape: f32[16,16], index: 6, kind: input, shape index: {}]
  %s7 = inlined_call_operand.vmem [shape: f32[8,16], index: 7, kind: input, shape index: {}]
  %s8 = inlined_call_operand.vmem [shape: f32[4,16], index: 8, kind: input, shape index: {}]
  %s9 = inlined_call_operand.hbm [shape: f32[2,1,16,16], index: 9, kind: output, shape index: {}]
  %s10 = sld [smem:[#allocation0]]
  $region73: #{tpu_custom_call.1} parent=0
    _
  %s12 = ssub.s32 1, %s10
  %s13 = scalar_select 0, %s12, %s10
  $region1: #{tpu_custom_call.1} parent=0
    #allocation2 [shape = 'u8[65536]{0}', space=vmem, size = 0x10000, scoped, tag = 'input window, operand 1']
    #allocation3 [shape = 's32[2]{0}', space=sflag, size = 0x8, scoped, tag = 'scoped memory for tpu_custom_call.1']
    #allocation4 [shape = 's32[2]{0}', space=sflag, size = 0x8, scoped, tag = 'scoped memory for tpu_custom_call.1']
    #allocation5 [shape = 'u8[16384]{0}', space=vmem, size = 0x4000, scoped, tag = 'output window, operand 0']
    %14 = vsyncpa [#allocation3], 0
    %s15 = scalar_lea.sflag [#allocation3], 1
    %16 = vsyncpa %s15, 0
    %17 = vsyncpa [#allocation4], 0
    %s18 = scalar_lea.sflag [#allocation4], 1
    %19 = vsyncpa %s18, 0
    loop: start=0, step=1, limit=4
    $region2: #{tpu_custom_call.1} parent=1 // loop_pre_header
      _
    $region3: #{tpu_custom_call.1} parent=1 // loop_header
      %s21 = sphi 0, %s25
      %p22 = scmp.ge.s32.totalorder %s21, 4
      %s31 = sphi 0, %s33
      %s34 = sphi 0, %s31
      %s35 = sphi 0, %s34
      %s51 = sphi 0, %s35
      %s57 = sphi 0, %s59
      %s60 = sphi 0, %s57
      %s61 = sphi 0, %s60
      %s77 = sphi 0, %s61
      %s83 = sphi 0, %s85
      %s86 = sphi 0, %s83
      %s87 = sphi 0, %s86
      %s103 = sphi 0, %s87
      %s107 = sphi 0, %s107
      %s109 = sphi 0, %s107
      %s110 = sphi 0, %s109
      %s124 = sphi 0, %s110
      %s128 = sphi 0, %s128
      %s130 = sphi 0, %s128
      %s131 = sphi 0, %s130
      %s145 = sphi 0, %s131
      %s149 = sphi 0, %s149
      %s151 = sphi 0, %s149
      %s152 = sphi 0, %s151
      %s166 = sphi 0, %s152
      %s170 = sphi 0, %s170
      %s172 = sphi 0, %s170
      %s173 = sphi 0, %s172
      %s187 = sphi 0, %s173
      %s191 = sphi 0, %s191
      %s193 = sphi 0, %s191
      %s194 = sphi 0, %s193
      %s208 = sphi 0, %s194
      %s212 = sphi 0, %s212
      %s214 = sphi 0, %s212
      %s215 = sphi 0, %s214
      %s229 = sphi 0, %s215
      %s235 = sphi 0, %s237
      %s238 = sphi 0, %s235
      %s239 = sphi 0, %s238
      %s255 = sphi 0, %s239
    $region4: #{tpu_custom_call.1} parent=1 // loop_header_branch
      %24 = sbr.rel (%p22) target = $region8
    $region5: #{tpu_custom_call.1} parent=1 // loop_body
      %s26 = ssub.s32 %s21, 1
      %s27 = ssub.s32 %s21, 2
      %s28 = sadd.s32 %s21, 1
      %s29 = ssub.s32 %s21, %s28
      %p30 = scmp.eq.s32.totalorder %s29, 0
      %s32 = sadd.s32 %s31, 1
      %s33 = scalar_select %p30, %s31, %s32
      %p36 = pneg %p30
      %p37 = scmp.eq.s32.totalorder %s21, 1
      %p38 = por %p36, %p37
      %p39 = scmp.ne.s32.totalorder %s31, %s34
      %p40 = scmp.eq.s32.totalorder %s21, 0
      %p41 = por %p39, %p40
      %p42 = scmp.ne.s32.totalorder %s31, %s34
      %p43 = scmp.eq.s32.totalorder %s26, 1
      %p44 = por %p42, %p43
      %p45 = scmp.ne.s32.totalorder %s34, %s35
      %p46 = scmp.eq.s32.totalorder %s26, 0
      %p47 = por %p45, %p46
      %p48 = scmp.ne.s32.totalorder %s34, %s35
      %p49 = scmp.eq.s32.totalorder %s27, 1
      %p50 = por %p48, %p49
      %p52 = scmp.ne.s32.totalorder %s35, %s51
      %p53 = scmp.eq.s32.totalorder %s27, 0
      %p54 = por %p52, %p53
      %s55 = ssub.s32 %s21, %s28
      %p56 = scmp.eq.s32.totalorder %s55, 0
      %s58 = sadd.s32 %s57, 1
      %s59 = scalar_select %p56, %s57, %s58
      %p62 = pneg %p56
      %p63 = scmp.eq.s32.totalorder %s21, 1
      %p64 = por %p62, %p63
      %p65 = scmp.ne.s32.totalorder %s57, %s60
      %p66 = scmp.eq.s32.totalorder %s21, 0
      %p67 = por %p65, %p66
      %p68 = scmp.ne.s32.totalorder %s57, %s60
      %p69 = scmp.eq.s32.totalorder %s26, 1
      %p70 = por %p68, %p69
      %p71 = scmp.ne.s32.totalorder %s60, %s61
      %p72 = scmp.eq.s32.totalorder %s26, 0
      %p73 = por %p71, %p72
      %p74 = scmp.ne.s32.totalorder %s60, %s61
      %p75 = scmp.eq.s32.totalorder %s27, 1
      %p76 = por %p74, %p75
      %p78 = scmp.ne.s32.totalorder %s61, %s77
      %p79 = scmp.eq.s32.totalorder %s27, 0
      %p80 = por %p78, %p79
      %s81 = ssub.s32 %s21, %s28
      %p82 = scmp.eq.s32.totalorder %s81, 0
      %s84 = sadd.s32 %s83, 1
      %s85 = scalar_select %p82, %s83, %s84
      %p88 = pneg %p82
      %p89 = scmp.eq.s32.totalorder %s21, 1
      %p90 = por %p88, %p89
      %p91 = scmp.ne.s32.totalorder %s83, %s86
      %p92 = scmp.eq.s32.totalorder %s21, 0
      %p93 = por %p91, %p92
      %p94 = scmp.ne.s32.totalorder %s83, %s86
      %p95 = scmp.eq.s32.totalorder %s26, 1
      %p96 = por %p94, %p95
      %p97 = scmp.ne.s32.totalorder %s86, %s87
      %p98 = scmp.eq.s32.totalorder %s26, 0
      %p99 = por %p97, %p98
      %p100 = scmp.ne.s32.totalorder %s86, %s87
      %p101 = scmp.eq.s32.totalorder %s27, 1
      %p102 = por %p100, %p101
      %p104 = scmp.ne.s32.totalorder %s87, %s103
      %p105 = scmp.eq.s32.totalorder %s27, 0
      %p106 = por %p104, %p105
      %s108 = sadd.s32 %s107, 1
      %p111 = scmp.eq.s32.totalorder %s21, 1
      %p112 = scmp.ne.s32.totalorder %s107, %s109
      %p113 = scmp.eq.s32.totalorder %s21, 0
      %p114 = por %p112, %p113
      %p115 = scmp.ne.s32.totalorder %s107, %s109
      %p116 = scmp.eq.s32.totalorder %s26, 1
      %p117 = por %p115, %p116
      %p118 = scmp.ne.s32.totalorder %s109, %s110
      %p119 = scmp.eq.s32.totalorder %s26, 0
      %p120 = por %p118, %p119
      %p121 = scmp.ne.s32.totalorder %s109, %s110
      %p122 = scmp.eq.s32.totalorder %s27, 1
      %p123 = por %p121, %p122
      %p125 = scmp.ne.s32.totalorder %s110, %s124
      %p126 = scmp.eq.s32.totalorder %s27, 0
      %p127 = por %p125, %p126
      %s129 = sadd.s32 %s128, 1
      %p132 = scmp.eq.s32.totalorder %s21, 1
      %p133 = scmp.ne.s32.totalorder %s128, %s130
      %p134 = scmp.eq.s32.totalorder %s21, 0
      %p135 = por %p133, %p134
      %p136 = scmp.ne.s32.totalorder %s128, %s130
      %p137 = scmp.eq.s32.totalorder %s26, 1
      %p138 = por %p136, %p137
      %p139 = scmp.ne.s32.totalorder %s130, %s131
      %p140 = scmp.eq.s32.totalorder %s26, 0
      %p141 = por %p139, %p140
      %p142 = scmp.ne.s32.totalorder %s130, %s131
      %p143 = scmp.eq.s32.totalorder %s27, 1
      %p144 = por %p142, %p143
      %p146 = scmp.ne.s32.totalorder %s131, %s145
      %p147 = scmp.eq.s32.totalorder %s27, 0
      %p148 = por %p146, %p147
      %s150 = sadd.s32 %s149, 1
      %p153 = scmp.eq.s32.totalorder %s21, 1
      %p154 = scmp.ne.s32.totalorder %s149, %s151
      %p155 = scmp.eq.s32.totalorder %s21, 0
      %p156 = por %p154, %p155
      %p157 = scmp.ne.s32.totalorder %s149, %s151
      %p158 = scmp.eq.s32.totalorder %s26, 1
      %p159 = por %p157, %p158
      %p160 = scmp.ne.s32.totalorder %s151, %s152
      %p161 = scmp.eq.s32.totalorder %s26, 0
      %p162 = por %p160, %p161
      %p163 = scmp.ne.s32.totalorder %s151, %s152
      %p164 = scmp.eq.s32.totalorder %s27, 1
      %p165 = por %p163, %p164
      %p167 = scmp.ne.s32.totalorder %s152, %s166
      %p168 = scmp.eq.s32.totalorder %s27, 0
      %p169 = por %p167, %p168
      %s171 = sadd.s32 %s170, 1
      %p174 = scmp.eq.s32.totalorder %s21, 1
      %p175 = scmp.ne.s32.totalorder %s170, %s172
      %p176 = scmp.eq.s32.totalorder %s21, 0
      %p177 = por %p175, %p176
      %p178 = scmp.ne.s32.totalorder %s170, %s172
      %p179 = scmp.eq.s32.totalorder %s26, 1
      %p180 = por %p178, %p179
      %p181 = scmp.ne.s32.totalorder %s172, %s173
      %p182 = scmp.eq.s32.totalorder %s26, 0
      %p183 = por %p181, %p182
      %p184 = scmp.ne.s32.totalorder %s172, %s173
      %p185 = scmp.eq.s32.totalorder %s27, 1
      %p186 = por %p184, %p185
      %p188 = scmp.ne.s32.totalorder %s173, %s187
      %p189 = scmp.eq.s32.totalorder %s27, 0
      %p190 = por %p188, %p189
      %s192 = sadd.s32 %s191, 1
      %p195 = scmp.eq.s32.totalorder %s21, 1
      %p196 = scmp.ne.s32.totalorder %s191, %s193
      %p197 = scmp.eq.s32.totalorder %s21, 0
      %p198 = por %p196, %p197
      %p199 = scmp.ne.s32.totalorder %s191, %s193
      %p200 = scmp.eq.s32.totalorder %s26, 1
      %p201 = por %p199, %p200
      %p202 = scmp.ne.s32.totalorder %s193, %s194
      %p203 = scmp.eq.s32.totalorder %s26, 0
      %p204 = por %p202, %p203
      %p205 = scmp.ne.s32.totalorder %s193, %s194
      %p206 = scmp.eq.s32.totalorder %s27, 1
      %p207 = por %p205, %p206
      %p209 = scmp.ne.s32.totalorder %s194, %s208
      %p210 = scmp.eq.s32.totalorder %s27, 0
      %p211 = por %p209, %p210
      %s213 = sadd.s32 %s212, 1
      %p216 = scmp.eq.s32.totalorder %s21, 1
      %p217 = scmp.ne.s32.totalorder %s212, %s214
      %p218 = scmp.eq.s32.totalorder %s21, 0
      %p219 = por %p217, %p218
      %p220 = scmp.ne.s32.totalorder %s212, %s214
      %p221 = scmp.eq.s32.totalorder %s26, 1
      %p222 = por %p220, %p221
      %p223 = scmp.ne.s32.totalorder %s214, %s215
      %p224 = scmp.eq.s32.totalorder %s26, 0
      %p225 = por %p223, %p224
      %p226 = scmp.ne.s32.totalorder %s214, %s215
      %p227 = scmp.eq.s32.totalorder %s27, 1
      %p228 = por %p226, %p227
      %p230 = scmp.ne.s32.totalorder %s215, %s229
      %p231 = scmp.eq.s32.totalorder %s27, 0
      %p232 = por %p230, %p231
      %s233 = ssub.s32 %s21, %s28
      %p234 = scmp.eq.s32.totalorder %s233, 0
      %s236 = sadd.s32 %s235, 1
      %s237 = scalar_select %p234, %s235, %s236
      %p240 = pneg %p234
      %p241 = scmp.eq.s32.totalorder %s21, 1
      %p242 = por %p240, %p241
      %p243 = scmp.ne.s32.totalorder %s235, %s238
      %p244 = scmp.eq.s32.totalorder %s21, 0
      %p245 = por %p243, %p244
      %p246 = scmp.ne.s32.totalorder %s235, %s238
      %p247 = scmp.eq.s32.totalorder %s26, 1
      %p248 = por %p246, %p247
      %p249 = scmp.ne.s32.totalorder %s238, %s239
      %p250 = scmp.eq.s32.totalorder %s26, 0
      %p251 = por %p249, %p250
      %p252 = scmp.ne.s32.totalorder %s238, %s239
      %p253 = scmp.eq.s32.totalorder %s27, 1
      %p254 = por %p252, %p253
      %p256 = scmp.ne.s32.totalorder %s239, %s255
      %p257 = scmp.eq.s32.totalorder %s27, 0
      %p258 = por %p256, %p257
      %p259 = scmp.le.s32.totalorder 1, %s21
      %p260 = scmp.lt.s32.totalorder %s21, 3
      %p261 = pnand %p259, %p260
      %p262 = pneg %p261
      // Predicated region
      $region9: #{tpu_custom_call.1} parent=5 // pred_check
        _
      $region10: #{tpu_custom_call.1} parent=5 // pred_check_branch
        %264 = sbr.rel (%p261) target = $region12
      $region11: #{tpu_custom_call.1} parent=5 // pred_region
        %s265 = ssub.s32 %s21, 1
        // Predicated region
        $region13: #{tpu_custom_call.1} parent=11 // pred_check
          %p266 = pneg %p120
        $region14: #{tpu_custom_call.1} parent=11 // pred_check_branch
          %268 = sbr.rel (%p266) target = $region16
        $region15: #{tpu_custom_call.1} parent=11 // pred_region
          _
        $region16: #{tpu_custom_call.1} parent=11 // pred_fallthru
          _
        // Predicated region
        $region17: #{tpu_custom_call.1} parent=11 // pred_check
          %p269 = pneg %p141
        $region18: #{tpu_custom_call.1} parent=11 // pred_check_branch
          %271 = sbr.rel (%p269) target = $region20
        $region19: #{tpu_custom_call.1} parent=11 // pred_region
          _
        $region20: #{tpu_custom_call.1} parent=11 // pred_fallthru
          _
        // Predicated region
        $region21: #{tpu_custom_call.1} parent=11 // pred_check
          %p272 = pneg %p162
        $region22: #{tpu_custom_call.1} parent=11 // pred_check_branch
          %274 = sbr.rel (%p272) target = $region24
        $region23: #{tpu_custom_call.1} parent=11 // pred_region
          _
        $region24: #{tpu_custom_call.1} parent=11 // pred_fallthru
          _
        // Predicated region
        $region25: #{tpu_custom_call.1} parent=11 // pred_check
          %p275 = pneg %p183
        $region26: #{tpu_custom_call.1} parent=11 // pred_check_branch
          %277 = sbr.rel (%p275) target = $region28
        $region27: #{tpu_custom_call.1} parent=11 // pred_region
          _
        $region28: #{tpu_custom_call.1} parent=11 // pred_fallthru
          _
        // Predicated region
        $region29: #{tpu_custom_call.1} parent=11 // pred_check
          %p278 = pneg %p204
        $region30: #{tpu_custom_call.1} parent=11 // pred_check_branch
          %280 = sbr.rel (%p278) target = $region32
        $region31: #{tpu_custom_call.1} parent=11 // pred_region
          _
        $region32: #{tpu_custom_call.1} parent=11 // pred_fallthru
          _
        // Predicated region
        $region33: #{tpu_custom_call.1} parent=11 // pred_check
          %p281 = pneg %p225
        $region34: #{tpu_custom_call.1} parent=11 // pred_check_branch
          %283 = sbr.rel (%p281) target = $region36
        $region35: #{tpu_custom_call.1} parent=11 // pred_region
          _
        $region36: #{tpu_custom_call.1} parent=11 // pred_fallthru
          _
      $region12: #{tpu_custom_call.1} parent=5 // pred_fallthru
        _
      %p284 = scmp.lt.s32.totalorder %s21, 2
      // Predicated region
      $region37: #{tpu_custom_call.1} parent=5 // pred_check
        %p285 = pneg %p284
      $region38: #{tpu_custom_call.1} parent=5 // pred_check_branch
        %287 = sbr.rel (%p285) target = $region40
      $region39: #{tpu_custom_call.1} parent=5 // pred_region
        // Predicated region
        $region41: #{tpu_custom_call.1} parent=39 // pred_check
          %p288 = pneg %p41
        $region42: #{tpu_custom_call.1} parent=39 // pred_check_branch
          %290 = sbr.rel (%p288) target = $region44
        $region43: #{tpu_custom_call.1} parent=39 // pred_region
          %p291 = scmp.lt.s32.totalorder %s21, 1
          %s292 = scalar_select %p291, %s21, 1
          %s293 = smul.addr %s292, 8
          %s294 = smul.addr %s293, 8
          %s295 = scalar_lea.vmem %s0, %s294
        $region44: #{tpu_custom_call.1} parent=39 // pred_fallthru
          _
        // Predicated region
        $region45: #{tpu_custom_call.1} parent=39 // pred_check
          %p296 = pneg %p67
        $region46: #{tpu_custom_call.1} parent=39 // pred_check_branch
          %298 = sbr.rel (%p296) target = $region48
        $region47: #{tpu_custom_call.1} parent=39 // pred_region
          %s299 = sand.u32 %s57, 1
          %s300 = scalar_lea.sflag [#allocation3], %s299
          %s301 = sand.u32 %s57, 1
          %s302 = smul.addr %s301, 64
          %s303 = scalar_lea.vmem [#allocation2], %s302
          %s305 = ssub.s32 1024, 1024
          %306 = vsyncadd %s300, %s305
          %s307 = smul.addr %s21, 8
          %s308 = smul.addr %s307, 128
          %s309 = scalar_lea.hbm %s1, %s308
          %s310 = sshll.u32 %s303, 4
          %s311 = int_to_ptr.vmem [resolvable:$true] %s310
          %316 = dma.hbm_to_vmem [thread:$0]  %s309, 1024, %s311, %s300, 128, 128, 8
        $region48: #{tpu_custom_call.1} parent=39 // pred_fallthru
          _
        // Predicated region
        $region49: #{tpu_custom_call.1} parent=39 // pred_check
          %p317 = pneg %p93
        $region50: #{tpu_custom_call.1} parent=39 // pred_check_branch
          %319 = sbr.rel (%p317) target = $region52
        $region51: #{tpu_custom_call.1} parent=39 // pred_region
          %p320 = scmp.lt.s32.totalorder %s21, 1
          %s321 = scalar_select %p320, %s21, 1
          %s322 = smul.addr %s321, 16
          %s323 = smul.addr %s322, 4
          %s324 = scalar_lea.vmem %s2, %s323
        $region52: #{tpu_custom_call.1} parent=39 // pred_fallthru
          _
      $region40: #{tpu_custom_call.1} parent=5 // pred_fallthru
        _
      %p325 = scmp.le.s32.totalorder 1, %s21
      %p326 = scmp.lt.s32.totalorder %s21, 3
      %p327 = pnand %p325, %p326
      %p328 = pneg %p327
      // Predicated region
      $region53: #{tpu_custom_call.1} parent=5 // pred_check
        _
      $region54: #{tpu_custom_call.1} parent=5 // pred_check_branch
        %330 = sbr.rel (%p327) target = $region56
      $region55: #{tpu_custom_call.1} parent=5 // pred_region
        %s331 = ssub.s32 %s21, 1
        %s332 = sand.u32 %s60, 1
        %s333 = scalar_lea.sflag [#allocation3], %s332
        %s334 = sand.u32 %s60, 1
        %s335 = smul.addr %s334, 64
        %s336 = scalar_lea.vmem [#allocation2], %s335
        // Predicated region
        $region57: #{tpu_custom_call.1} parent=55 // pred_check
          %p337 = pneg %p73
        $region58: #{tpu_custom_call.1} parent=55 // pred_check_branch
          %339 = sbr.rel (%p337) target = $region60
        $region59: #{tpu_custom_call.1} parent=55 // pred_region
          %340 = dma.done %s333, 1024
        $region60: #{tpu_custom_call.1} parent=55 // pred_fallthru
          _
        %p341 = scmp.lt.s32.totalorder %s26, 1
        %s342 = scalar_select %p341, %s26, 1
        %s343 = smul.addr %s342, 8
        %s344 = smul.addr %s343, 8
        %s345 = scalar_lea.vmem %s0, %s344
        %p346 = pneg %p47
        %p347 = pneg %p44
        %s348 = sand.u32 %s60, 1
        %s349 = scalar_lea.sflag [#allocation3], %s348
        %s350 = sand.u32 %s60, 1
        %s351 = smul.addr %s350, 64
        %s352 = scalar_lea.vmem [#allocation2], %s351
        %p353 = pneg %p73
        %p354 = pneg %p70
        %p355 = scmp.lt.s32.totalorder %s26, 1
        %s356 = scalar_select %p355, %s26, 1
        %s357 = smul.addr %s356, 16
        %s358 = smul.addr %s357, 4
        %s359 = scalar_lea.vmem %s2, %s358
        %p360 = pneg %p99
        %p361 = pneg %p96
        %p362 = pneg %p120
        %p363 = pneg %p117
        %p364 = pneg %p141
        %p365 = pneg %p138
        %p366 = pneg %p162
        %p367 = pneg %p159
        %p368 = pneg %p183
        %p369 = pneg %p180
        %p370 = pneg %p204
        %p371 = pneg %p201
        %p372 = pneg %p225
        %p373 = pneg %p222
        %p374 = pneg %p251
        %p375 = pneg %p248
        %s376 = sand.u32 %s238, 1
        %s377 = scalar_lea.sflag [#allocation4], %s376
        %s378 = sand.u32 %s238, 1
        %s379 = smul.addr %s378, 16
        %s380 = scalar_lea.vmem [#allocation5], %s379
        %p381 = scmp.lt.s32.totalorder %s26, 1
        %s382 = scalar_select %p381, %s26, 1
        %s383 = smul.addr %s382, 8
        %s384 = smul.addr %s383, 8
        %s385 = scalar_lea.vmem %s0, %s384
        %p386 = scmp.lt.s32.totalorder %s26, 1
        %s387 = scalar_select %p386, %s26, 1
        %s388 = smul.addr %s387, 16
        %s389 = smul.addr %s388, 4
        %s390 = scalar_lea.vmem %s2, %s389
        %v391 = vld [vmem:[%s385] sm:$0xff]
        %v392 = vld [vmem:[%s385 + $0x8] sm:$0xff]
        %v393 = vld [vmem:[%s385 + $0x10] sm:$0xff]
        %v394 = vld [vmem:[%s385 + $0x18] sm:$0xff]
        %v395 = vld [vmem:[%s385 + $0x20] sm:$0xff]
        %v396 = vld [vmem:[%s385 + $0x28] sm:$0xff]
        %v397 = vld [vmem:[%s385 + $0x30] sm:$0xff]
        %v398 = vld [vmem:[%s385 + $0x38] sm:$0xff]
        %v399 = vmul.f32 %v391, %v391
        %v400 = vmul.f32 %v392, %v392
        %v401 = vmul.f32 %v393, %v393
        %v402 = vmul.f32 %v394, %v394
        %v403 = vmul.f32 %v395, %v395
        %v404 = vmul.f32 %v396, %v396
        %v405 = vmul.f32 %v397, %v397
        %v406 = vmul.f32 %v398, %v398
        %vm407 = vcmask 130048
        %v408 = vsel %vm407, %v399, 0.0
        %v409 = vsel %vm407, %v401, 0.0
        %v410 = vadd.f32 %v408, %v409
        %v411 = vsel %vm407, %v403, 0.0
        %v412 = vadd.f32 %v410, %v411
        %v413 = vsel %vm407, %v405, 0.0
        %v414 = vadd.f32 %v412, %v413
        %v415 = vsel %vm407, %v400, 0.0
        %v416 = vsel %vm407, %v402, 0.0
        %v417 = vadd.f32 %v415, %v416
        %v418 = vsel %vm407, %v404, 0.0
        %v419 = vadd.f32 %v417, %v418
        %v420 = vsel %vm407, %v406, 0.0
        %v421 = vadd.f32 %v419, %v420
        %v422 = vrcp.pop 4.0
        %v423 = vmul.f32 %v414, %v422
        %v424 = vmul.f32 %v421, %v422
        %v425 = vmul.f32 %v423, -0.5
        %v426 = vmul.f32 %v424, -0.5
        %v427 = vmul.f32 %v425, 1.442695
        %v428 = vpow.pop %v427
        %v429 = vmul.f32 %v426, 1.442695
        %v430 = vpow.pop %v429
        %v431 = vsub.f32 0.0, %v428
        %v432 = vsub.f32 0.0, %v430
        %v433 = vld [vmem:[%s3] sm:$0xff]
        %v434 = vld [vmem:[%s3 + $0x8] sm:$0xff]
        %v436 = vsel %vm407, %v433, 0
        %v439 = vsel %vm407, %v434, 0
        %441 = vmatprep.subr.mxu0 0.0
        %442 = vmatpush1.msra.mxu0 %v431
        %443 = vmatprep.subr.mxu0 0.0
        %444 = vmatpush1.msra.mxu0 %v432
        %445 = vmatprep.subr.mxu0 0.0
        %446 = vmatpush1.msra.mxu0 0.0
        %447 = vmatprep.subr.mxu0 0.0
        %448 = vmatpush1.msra.mxu0 0.0
        %449 = vmatprep.subr.mxu0 0.0
        %450 = vmatpush1.msra.mxu0 0.0
        %451 = vmatprep.subr.mxu0 0.0
        %452 = vmatpush1.msra.mxu0 0.0
        %453 = vmatprep.subr.mxu0 0.0
        %454 = vmatpush1.msra.mxu0 0.0
        %455 = vmatprep.subr.mxu0 0.0
        %456 = vmatpush1.msra.mxu0 0.0
        %457 = vmatprep.subr.mxu0 0.0
        %458 = vmatpush1.msra.mxu0 0.0
        %459 = vmatprep.subr.mxu0 0.0
        %460 = vmatpush1.msra.mxu0 0.0
        %461 = vmatprep.subr.mxu0 0.0
        %462 = vmatpush1.msra.mxu0 0.0
        %463 = vmatprep.subr.mxu0 0.0
        %464 = vmatpush1.msra.mxu0 0.0
        %465 = vmatprep.subr.mxu0 0.0
        %466 = vmatpush1.msra.mxu0 0.0
        %467 = vmatprep.subr.mxu0 0.0
        %468 = vmatpush1.msra.mxu0 0.0
        %469 = vmatprep.subr.mxu0 0.0
        %470 = vmatpush1.msra.mxu0 0.0
        %471 = vmatprep.subr.mxu0 0.0
        %472 = vmatpush1.msra.mxu0 0.0
        %473 = vmatprep.subr.mxu0 0.0
        %474 = vmatpush1.msra.mxu0 0.0
        %475 = vmatprep.subr.mxu0 0.0
        %476 = vmatpush1.msra.mxu0 0.0
        %477 = vmatprep.subr.mxu0 0.0
        %478 = vmatpush1.msra.mxu0 0.0
        %479 = vmatprep.subr.mxu0 0.0
        %480 = vmatpush1.msra.mxu0 0.0
        %481 = vmatprep.subr.mxu0 0.0
        %482 = vmatpush1.msra.mxu0 0.0
        %483 = vmatprep.subr.mxu0 0.0
        %484 = vmatpush1.msra.mxu0 0.0
        %485 = vmatprep.subr.mxu0 0.0
        %486 = vmatpush1.msra.mxu0 0.0
        %487 = vmatprep.subr.mxu0 0.0
        %488 = vmatpush1.msra.mxu0 0.0
        %489 = vmatprep.subr.mxu0 0.0
        %490 = vmatpush1.msra.mxu0 0.0
        %491 = vmatprep.subr.mxu0 0.0
        %492 = vmatpush1.msra.mxu0 0.0
        %493 = vmatprep.subr.mxu0 0.0
        %494 = vmatpush1.msra.mxu0 0.0
        %495 = vmatprep.subr.mxu0 0.0
        %496 = vmatpush1.msra.mxu0 0.0
        %497 = vmatprep.subr.mxu0 0.0
        %498 = vmatpush1.msra.mxu0 0.0
        %499 = vmatprep.subr.mxu0 0.0
        %500 = vmatpush1.msra.mxu0 0.0
        %501 = vmatprep.subr.mxu0 0.0
        %502 = vmatpush1.msra.mxu0 0.0
        %503 = vmatprep.subr.mxu0 0.0
        %504 = vmatpush1.msra.mxu0 0.0
        %505 = vmatprep.mubr.f32.mxu0 0.0
        %506 = vmatmul.mubr.f32.gmra.mrb[0].mxu0 %v436
        %v507 = vpop.f32.mrb[0].mxu0
        %v508 = vadd.f32 0.0, %v507
        %v509 = vpop.f32.mrb[0].mxu0
        %510 = vmatprep.mubr.f32.mxu0 0.0
        %511 = vmatmul.mubr.f32.gmra.mrb[0].mxu0 %v439
        %v512 = vpop.f32.mrb[0].mxu0
        %v513 = vadd.f32 0.0, %v512
        %v514 = vpop.f32.mrb[0].mxu0
        %515 = vdwg.mxu0
        %v516 = vld [vmem:[%s6] sm:$0xff]
        %v517 = vld [vmem:[%s6 + $0x8] sm:$0xff]
        %v518 = vld [vmem:[%s336] sm:$0xff]
        %v519 = vld [vmem:[%s336 + $0x8] sm:$0xff]
        %v520 = vld [vmem:[%s336 + $0x10] sm:$0xff]
        %v521 = vld [vmem:[%s336 + $0x18] sm:$0xff]
        %v522 = vld [vmem:[%s336 + $0x20] sm:$0xff]
        %v523 = vld [vmem:[%s336 + $0x28] sm:$0xff]
        %v524 = vld [vmem:[%s336 + $0x30] sm:$0xff]
        %v525 = vld [vmem:[%s336 + $0x38] sm:$0xff]
        %v526 = vmul.f32 %v518, %v518
        %v527 = vmul.f32 %v519, %v519
        %v528 = vmul.f32 %v520, %v520
        %v529 = vmul.f32 %v521, %v521
        %v530 = vmul.f32 %v522, %v522
        %v531 = vmul.f32 %v523, %v523
        %v532 = vmul.f32 %v524, %v524
        %v533 = vmul.f32 %v525, %v525
        %vm534 = vcmask 64512
        %v535 = vsel %vm534, %v526, 0.0
        %v536 = vsel %vm534, %v527, 0.0
        %v537 = vadd.f32 %v535, %v536
        %v538 = vsel %vm534, %v528, 0.0
        %v539 = vadd.f32 %v537, %v538
        %v540 = vsel %vm534, %v529, 0.0
        %v541 = vadd.f32 %v539, %v540
        %v542 = vsel %vm534, %v530, 0.0
        %v543 = vadd.f32 %v541, %v542
        %v544 = vsel %vm534, %v531, 0.0
        %v545 = vadd.f32 %v543, %v544
        %v546 = vsel %vm534, %v532, 0.0
        %v547 = vadd.f32 %v545, %v546
        %v548 = vsel %vm534, %v533, 0.0
        %v549 = vadd.f32 %v547, %v548
        %v550 = vrcp.pop 8.0
        %v551 = vmul.f32 %v549, %v550
        %v552 = vmul.f32 %v551, -0.5
        %v553 = vmul.f32 %v552, 1.442695
        %v554 = vpow.pop %v553
        %v555 = vsub.f32 0.0, %v554
        %v556 = vld [vmem:[%s4] sm:$0xff]
        %v557 = vld [vmem:[%s4 + $0x8] sm:$0xff]
        %v559 = vsel %vm534, %v556, 0
        %v562 = vsel %vm534, %v557, 0
        %564 = vmatprep.subr.mxu0 0.0
        %565 = vmatpush1.msra.mxu0 %v555
        %566 = vmatprep.subr.mxu0 0.0
        %567 = vmatpush1.msra.mxu0 0.0
        %568 = vmatprep.subr.mxu0 0.0
        %569 = vmatpush1.msra.mxu0 0.0
        %570 = vmatprep.subr.mxu0 0.0
        %571 = vmatpush1.msra.mxu0 0.0
        %572 = vmatprep.subr.mxu0 0.0
        %573 = vmatpush1.msra.mxu0 0.0
        %574 = vmatprep.subr.mxu0 0.0
        %575 = vmatpush1.msra.mxu0 0.0
        %576 = vmatprep.subr.mxu0 0.0
        %577 = vmatpush1.msra.mxu0 0.0
        %578 = vmatprep.subr.mxu0 0.0
        %579 = vmatpush1.msra.mxu0 0.0
        %580 = vmatprep.subr.mxu0 0.0
        %581 = vmatpush1.msra.mxu0 0.0
        %582 = vmatprep.subr.mxu0 0.0
        %583 = vmatpush1.msra.mxu0 0.0
        %584 = vmatprep.subr.mxu0 0.0
        %585 = vmatpush1.msra.mxu0 0.0
        %586 = vmatprep.subr.mxu0 0.0
        %587 = vmatpush1.msra.mxu0 0.0
        %588 = vmatprep.subr.mxu0 0.0
        %589 = vmatpush1.msra.mxu0 0.0
        %590 = vmatprep.subr.mxu0 0.0
        %591 = vmatpush1.msra.mxu0 0.0
        %592 = vmatprep.subr.mxu0 0.0
        %593 = vmatpush1.msra.mxu0 0.0
        %594 = vmatprep.subr.mxu0 0.0
        %595 = vmatpush1.msra.mxu0 0.0
        %596 = vmatprep.subr.mxu0 0.0
        %597 = vmatpush1.msra.mxu0 0.0
        %598 = vmatprep.subr.mxu0 0.0
        %599 = vmatpush1.msra.mxu0 0.0
        %600 = vmatprep.subr.mxu0 0.0
        %601 = vmatpush1.msra.mxu0 0.0
        %602 = vmatprep.subr.mxu0 0.0
        %603 = vmatpush1.msra.mxu0 0.0
        %604 = vmatprep.subr.mxu0 0.0
        %605 = vmatpush1.msra.mxu0 0.0
        %606 = vmatprep.subr.mxu0 0.0
        %607 = vmatpush1.msra.mxu0 0.0
        %608 = vmatprep.subr.mxu0 0.0
        %609 = vmatpush1.msra.mxu0 0.0
        %610 = vmatprep.subr.mxu0 0.0
        %611 = vmatpush1.msra.mxu0 0.0
        %612 = vmatprep.subr.mxu0 0.0
        %613 = vmatpush1.msra.mxu0 0.0
        %614 = vmatprep.subr.mxu0 0.0
        %615 = vmatpush1.msra.mxu0 0.0
        %616 = vmatprep.subr.mxu0 0.0
        %617 = vmatpush1.msra.mxu0 0.0
        %618 = vmatprep.subr.mxu0 0.0
        %619 = vmatpush1.msra.mxu0 0.0
        %620 = vmatprep.subr.mxu0 0.0
        %621 = vmatpush1.msra.mxu0 0.0
        %622 = vmatprep.subr.mxu0 0.0
        %623 = vmatpush1.msra.mxu0 0.0
        %624 = vmatprep.subr.mxu0 0.0
        %625 = vmatpush1.msra.mxu0 0.0
        %626 = vmatprep.subr.mxu0 0.0
        %627 = vmatpush1.msra.mxu0 0.0
        %628 = vmatprep.mubr.f32.mxu0 0.0
        %629 = vmatmul.mubr.f32.gmra.mrb[0].mxu0 %v559
        %v630 = vpop.f32.mrb[0].mxu0
        %v631 = vadd.f32 0.0, %v630
        %v632 = vpop.f32.mrb[0].mxu0
        %633 = vmatprep.mubr.f32.mxu0 0.0
        %634 = vmatmul.mubr.f32.gmra.mrb[0].mxu0 %v562
        %v635 = vpop.f32.mrb[0].mxu0
        %v636 = vadd.f32 0.0, %v635
        %v637 = vpop.f32.mrb[0].mxu0
        %638 = vdwg.mxu0
        %v639 = vld [vmem:[%s7] sm:$0xff]
        %v641 = vsel %vm534, %v631, 0
        %v644 = vsel %vm534, %v636, 0
        %646 = vmatprep.subr.mxu0 0.0
        %647 = vmatpush1.msra.mxu0 %v639
        %648 = vmatprep.subr.mxu0 0.0
        %649 = vmatpush1.msra.mxu0 0.0
        %650 = vmatprep.subr.mxu0 0.0
        %651 = vmatpush1.msra.mxu0 0.0
        %652 = vmatprep.subr.mxu0 0.0
        %653 = vmatpush1.msra.mxu0 0.0
        %654 = vmatprep.subr.mxu0 0.0
        %655 = vmatpush1.msra.mxu0 0.0
        %656 = vmatprep.subr.mxu0 0.0
        %657 = vmatpush1.msra.mxu0 0.0
        %658 = vmatprep.subr.mxu0 0.0
        %659 = vmatpush1.msra.mxu0 0.0
        %660 = vmatprep.subr.mxu0 0.0
        %661 = vmatpush1.msra.mxu0 0.0
        %662 = vmatprep.subr.mxu0 0.0
        %663 = vmatpush1.msra.mxu0 0.0
        %664 = vmatprep.subr.mxu0 0.0
        %665 = vmatpush1.msra.mxu0 0.0
        %666 = vmatprep.subr.mxu0 0.0
        %667 = vmatpush1.msra.mxu0 0.0
        %668 = vmatprep.subr.mxu0 0.0
        %669 = vmatpush1.msra.mxu0 0.0
        %670 = vmatprep.subr.mxu0 0.0
        %671 = vmatpush1.msra.mxu0 0.0
        %672 = vmatprep.subr.mxu0 0.0
        %673 = vmatpush1.msra.mxu0 0.0
        %674 = vmatprep.subr.mxu0 0.0
        %675 = vmatpush1.msra.mxu0 0.0
        %676 = vmatprep.subr.mxu0 0.0
        %677 = vmatpush1.msra.mxu0 0.0
        %678 = vmatprep.subr.mxu0 0.0
        %679 = vmatpush1.msra.mxu0 0.0
        %680 = vmatprep.subr.mxu0 0.0
        %681 = vmatpush1.msra.mxu0 0.0
        %682 = vmatprep.subr.mxu0 0.0
        %683 = vmatpush1.msra.mxu0 0.0
        %684 = vmatprep.subr.mxu0 0.0
        %685 = vmatpush1.msra.mxu0 0.0
        %686 = vmatprep.subr.mxu0 0.0
        %687 = vmatpush1.msra.mxu0 0.0
        %688 = vmatprep.subr.mxu0 0.0
        %689 = vmatpush1.msra.mxu0 0.0
        %690 = vmatprep.subr.mxu0 0.0
        %691 = vmatpush1.msra.mxu0 0.0
        %692 = vmatprep.subr.mxu0 0.0
        %693 = vmatpush1.msra.mxu0 0.0
        %694 = vmatprep.subr.mxu0 0.0
        %695 = vmatpush1.msra.mxu0 0.0
        %696 = vmatprep.subr.mxu0 0.0
        %697 = vmatpush1.msra.mxu0 0.0
        %698 = vmatprep.subr.mxu0 0.0
        %699 = vmatpush1.msra.mxu0 0.0
        %700 = vmatprep.subr.mxu0 0.0
        %701 = vmatpush1.msra.mxu0 0.0
        %702 = vmatprep.subr.mxu0 0.0
        %703 = vmatpush1.msra.mxu0 0.0
        %704 = vmatprep.subr.mxu0 0.0
        %705 = vmatpush1.msra.mxu0 0.0
        %706 = vmatprep.subr.mxu0 0.0
        %707 = vmatpush1.msra.mxu0 0.0
        %708 = vmatprep.subr.mxu0 0.0
        %709 = vmatpush1.msra.mxu0 0.0
        %710 = vmatprep.mubr.f32.mxu0 0.0
        %711 = vmatmul.mubr.f32.gmra.mrb[0].mxu0 %v641
        %v712 = vpop.f32.mrb[0].mxu0
        %v713 = vadd.f32 0.0, %v712
        %v714 = vpop.f32.mrb[0].mxu0
        %715 = vmatprep.mubr.f32.mxu0 0.0
        %716 = vmatmul.mubr.f32.gmra.mrb[0].mxu0 %v644
        %v717 = vpop.f32.mrb[0].mxu0
        %v718 = vadd.f32 0.0, %v717
        %v719 = vpop.f32.mrb[0].mxu0
        %720 = vdwg.mxu0
        %v722 = vsel %vm407, %v508, 0
        %v725 = vsel %vm407, %v513, 0
        %727 = vmatprep.subr.mxu0 0.0
        %728 = vmatpush1.msra.mxu0 %v516
        %729 = vmatprep.subr.mxu0 0.0
        %730 = vmatpush1.msra.mxu0 %v517
        %731 = vmatprep.subr.mxu0 0.0
        %732 = vmatpush1.msra.mxu0 0.0
        %733 = vmatprep.subr.mxu0 0.0
        %734 = vmatpush1.msra.mxu0 0.0
        %735 = vmatprep.subr.mxu0 0.0
        %736 = vmatpush1.msra.mxu0 0.0
        %737 = vmatprep.subr.mxu0 0.0
        %738 = vmatpush1.msra.mxu0 0.0
        %739 = vmatprep.subr.mxu0 0.0
        %740 = vmatpush1.msra.mxu0 0.0
        %741 = vmatprep.subr.mxu0 0.0
        %742 = vmatpush1.msra.mxu0 0.0
        %743 = vmatprep.subr.mxu0 0.0
        %744 = vmatpush1.msra.mxu0 0.0
        %745 = vmatprep.subr.mxu0 0.0
        %746 = vmatpush1.msra.mxu0 0.0
        %747 = vmatprep.subr.mxu0 0.0
        %748 = vmatpush1.msra.mxu0 0.0
        %749 = vmatprep.subr.mxu0 0.0
        %750 = vmatpush1.msra.mxu0 0.0
        %751 = vmatprep.subr.mxu0 0.0
        %752 = vmatpush1.msra.mxu0 0.0
        %753 = vmatprep.subr.mxu0 0.0
        %754 = vmatpush1.msra.mxu0 0.0
        %755 = vmatprep.subr.mxu0 0.0
        %756 = vmatpush1.msra.mxu0 0.0
        %757 = vmatprep.subr.mxu0 0.0
        %758 = vmatpush1.msra.mxu0 0.0
        %759 = vmatprep.subr.mxu0 0.0
        %760 = vmatpush1.msra.mxu0 0.0
        %761 = vmatprep.subr.mxu0 0.0
        %762 = vmatpush1.msra.mxu0 0.0
        %763 = vmatprep.subr.mxu0 0.0
        %764 = vmatpush1.msra.mxu0 0.0
        %765 = vmatprep.subr.mxu0 0.0
        %766 = vmatpush1.msra.mxu0 0.0
        %767 = vmatprep.subr.mxu0 0.0
        %768 = vmatpush1.msra.mxu0 0.0
        %769 = vmatprep.subr.mxu0 0.0
        %770 = vmatpush1.msra.mxu0 0.0
        %771 = vmatprep.subr.mxu0 0.0
        %772 = vmatpush1.msra.mxu0 0.0
        %773 = vmatprep.subr.mxu0 0.0
        %774 = vmatpush1.msra.mxu0 0.0
        %775 = vmatprep.subr.mxu0 0.0
        %776 = vmatpush1.msra.mxu0 0.0
        %777 = vmatprep.subr.mxu0 0.0
        %778 = vmatpush1.msra.mxu0 0.0
        %779 = vmatprep.subr.mxu0 0.0
        %780 = vmatpush1.msra.mxu0 0.0
        %781 = vmatprep.subr.mxu0 0.0
        %782 = vmatpush1.msra.mxu0 0.0
        %783 = vmatprep.subr.mxu0 0.0
        %784 = vmatpush1.msra.mxu0 0.0
        %785 = vmatprep.subr.mxu0 0.0
        %786 = vmatpush1.msra.mxu0 0.0
        %787 = vmatprep.subr.mxu0 0.0
        %788 = vmatpush1.msra.mxu0 0.0
        %789 = vmatprep.subr.mxu0 0.0
        %790 = vmatpush1.msra.mxu0 0.0
        %791 = vmatprep.mubr.f32.mxu0 0.0
        %792 = vmatmul.mubr.f32.gmra.mrb[0].mxu0 %v722
        %v793 = vpop.f32.mrb[0].mxu0
        %v794 = vadd.f32 %v713, %v793
        %v795 = vpop.f32.mrb[0].mxu0
        %796 = vmatprep.mubr.f32.mxu0 0.0
        %797 = vmatmul.mubr.f32.gmra.mrb[0].mxu0 %v725
        %v798 = vpop.f32.mrb[0].mxu0
        %v799 = vadd.f32 %v718, %v798
        %v800 = vpop.f32.mrb[0].mxu0
        %801 = vdwg.mxu0
        %v802 = vld [vmem:[%s390] sm:$0xf]
        %v803 = vld [vmem:[%s390 + $0x4] sm:$0xf]
        %v804 = vld [vmem:[%s390 + $0x8] sm:$0xf]
        %v805 = vld [vmem:[%s390 + $0xc] sm:$0xf]
        %v806 = vld [vmem:[%s390 + $0x10] sm:$0xf]
        %v807 = vld [vmem:[%s390 + $0x14] sm:$0xf]
        %v808 = vld [vmem:[%s390 + $0x18] sm:$0xf]
        %v809 = vld [vmem:[%s390 + $0x1c] sm:$0xf]
        %v810 = vld [vmem:[%s390 + $0x20] sm:$0xf]
        %v811 = vld [vmem:[%s390 + $0x24] sm:$0xf]
        %v812 = vld [vmem:[%s390 + $0x28] sm:$0xf]
        %v813 = vld [vmem:[%s390 + $0x2c] sm:$0xf]
        %v814 = vld [vmem:[%s390 + $0x30] sm:$0xf]
        %v815 = vld [vmem:[%s390 + $0x34] sm:$0xf]
        %v816 = vld [vmem:[%s390 + $0x38] sm:$0xf]
        %v817 = vld [vmem:[%s390 + $0x3c] sm:$0xf]
        %v818 = vmul.f32 %v802, %v802
        %v819 = vmul.f32 %v803, %v803
        %v820 = vmul.f32 %v804, %v804
        %v821 = vmul.f32 %v805, %v805
        %v822 = vmul.f32 %v806, %v806
        %v823 = vmul.f32 %v807, %v807
        %v824 = vmul.f32 %v808, %v808
        %v825 = vmul.f32 %v809, %v809
        %v826 = vmul.f32 %v810, %v810
        %v827 = vmul.f32 %v811, %v811
        %v828 = vmul.f32 %v812, %v812
        %v829 = vmul.f32 %v813, %v813
        %v830 = vmul.f32 %v814, %v814
        %v831 = vmul.f32 %v815, %v815
        %v832 = vmul.f32 %v816, %v816
        %v833 = vmul.f32 %v817, %v817
        %vm834 = vcmask 27648
        %v835 = vsel %vm834, %v818, 0.0
        %v836 = vsel %vm834, %v819, 0.0
        %v837 = vadd.f32 %v835, %v836
        %v838 = vsel %vm834, %v820, 0.0
        %v839 = vadd.f32 %v837, %v838
        %v840 = vsel %vm834, %v821, 0.0
        %v841 = vadd.f32 %v839, %v840
        %v842 = vsel %vm834, %v822, 0.0
        %v843 = vadd.f32 %v841, %v842
        %v844 = vsel %vm834, %v823, 0.0
        %v845 = vadd.f32 %v843, %v844
        %v846 = vsel %vm834, %v824, 0.0
        %v847 = vadd.f32 %v845, %v846
        %v848 = vsel %vm834, %v825, 0.0
        %v849 = vadd.f32 %v847, %v848
        %v850 = vsel %vm834, %v826, 0.0
        %v851 = vadd.f32 %v849, %v850
        %v852 = vsel %vm834, %v827, 0.0
        %v853 = vadd.f32 %v851, %v852
        %v854 = vsel %vm834, %v828, 0.0
        %v855 = vadd.f32 %v853, %v854
        %v856 = vsel %vm834, %v829, 0.0
        %v857 = vadd.f32 %v855, %v856
        %v858 = vsel %vm834, %v830, 0.0
        %v859 = vadd.f32 %v857, %v858
        %v860 = vsel %vm834, %v831, 0.0
        %v861 = vadd.f32 %v859, %v860
        %v862 = vsel %vm834, %v832, 0.0
        %v863 = vadd.f32 %v861, %v862
        %v864 = vsel %vm834, %v833, 0.0
        %v865 = vadd.f32 %v863, %v864
        %v866 = vrcp.pop 16.0
        %v867 = vmul.f32 %v865, %v866
        %v868 = vmul.f32 %v867, -0.5
        %v869 = vmul.f32 %v868, 1.442695
        %v870 = vpow.pop %v869
        %v871 = vsub.f32 0.0, %v870
        %v872 = vld [vmem:[%s5] sm:$0xff]
        %v873 = vld [vmem:[%s5 + $0x8] sm:$0xff]
        %vm874 = vcmask 31744
        %v876 = vsel %vm874, %v872, 0
        %v879 = vsel %vm874, %v873, 0
        %vm881 = vcmask 1043456
        %v883 = vsel %vm881, %v871, 0
        %885 = vmatprep.subr.mxu0 0.0
        %886 = vmatpush1.msra.mxu0 %v883
        %887 = vmatprep.subr.mxu0 0.0
        %888 = vmatpush1.msra.mxu0 0.0
        %889 = vmatprep.subr.mxu0 0.0
        %890 = vmatpush1.msra.mxu0 0.0
        %891 = vmatprep.subr.mxu0 0.0
        %892 = vmatpush1.msra.mxu0 0.0
        %893 = vmatprep.subr.mxu0 0.0
        %894 = vmatpush1.msra.mxu0 0.0
        %895 = vmatprep.subr.mxu0 0.0
        %896 = vmatpush1.msra.mxu0 0.0
        %897 = vmatprep.subr.mxu0 0.0
        %898 = vmatpush1.msra.mxu0 0.0
        %899 = vmatprep.subr.mxu0 0.0
        %900 = vmatpush1.msra.mxu0 0.0
        %901 = vmatprep.subr.mxu0 0.0
        %902 = vmatpush1.msra.mxu0 0.0
        %903 = vmatprep.subr.mxu0 0.0
        %904 = vmatpush1.msra.mxu0 0.0
        %905 = vmatprep.subr.mxu0 0.0
        %906 = vmatpush1.msra.mxu0 0.0
        %907 = vmatprep.subr.mxu0 0.0
        %908 = vmatpush1.msra.mxu0 0.0
        %909 = vmatprep.subr.mxu0 0.0
        %910 = vmatpush1.msra.mxu0 0.0
        %911 = vmatprep.subr.mxu0 0.0
        %912 = vmatpush1.msra.mxu0 0.0
        %913 = vmatprep.subr.mxu0 0.0
        %914 = vmatpush1.msra.mxu0 0.0
        %915 = vmatprep.subr.mxu0 0.0
        %916 = vmatpush1.msra.mxu0 0.0
        %917 = vmatprep.subr.mxu0 0.0
        %918 = vmatpush1.msra.mxu0 0.0
        %919 = vmatprep.subr.mxu0 0.0
        %920 = vmatpush1.msra.mxu0 0.0
        %921 = vmatprep.subr.mxu0 0.0
        %922 = vmatpush1.msra.mxu0 0.0
        %923 = vmatprep.subr.mxu0 0.0
        %924 = vmatpush1.msra.mxu0 0.0
        %925 = vmatprep.subr.mxu0 0.0
        %926 = vmatpush1.msra.mxu0 0.0
        %927 = vmatprep.subr.mxu0 0.0
        %928 = vmatpush1.msra.mxu0 0.0
        %929 = vmatprep.subr.mxu0 0.0
        %930 = vmatpush1.msra.mxu0 0.0
        %931 = vmatprep.subr.mxu0 0.0
        %932 = vmatpush1.msra.mxu0 0.0
        %933 = vmatprep.subr.mxu0 0.0
        %934 = vmatpush1.msra.mxu0 0.0
        %935 = vmatprep.subr.mxu0 0.0
        %936 = vmatpush1.msra.mxu0 0.0
        %937 = vmatprep.subr.mxu0 0.0
        %938 = vmatpush1.msra.mxu0 0.0
        %939 = vmatprep.subr.mxu0 0.0
        %940 = vmatpush1.msra.mxu0 0.0
        %941 = vmatprep.subr.mxu0 0.0
        %942 = vmatpush1.msra.mxu0 0.0
        %943 = vmatprep.subr.mxu0 0.0
        %944 = vmatpush1.msra.mxu0 0.0
        %945 = vmatprep.subr.mxu0 0.0
        %946 = vmatpush1.msra.mxu0 0.0
        %947 = vmatprep.subr.mxu0 0.0
        %948 = vmatpush1.msra.mxu0 0.0
        %949 = vmatprep.mubr.f32.mxu0 0.0
        %950 = vmatmul.mubr.f32.gmra.mrb[0].mxu0 %v876
        %v951 = vpop.f32.mrb[0].mxu0
        %v952 = vadd.f32 0.0, %v951
        %v953 = vpop.f32.mrb[0].mxu0
        %954 = vmatprep.mubr.f32.mxu0 0.0
        %955 = vmatmul.mubr.f32.gmra.mrb[0].mxu0 %v879
        %v956 = vpop.f32.mrb[0].mxu0
        %v957 = vadd.f32 0.0, %v956
        %v958 = vpop.f32.mrb[0].mxu0
        %959 = vdwg.mxu0
        %v960 = vld [vmem:[%s8] sm:$0xf]
        %v962 = vsel %vm874, %v952, 0
        %v965 = vsel %vm874, %v957, 0
        %v968 = vsel %vm881, %v960, 0
        %970 = vmatprep.subr.mxu0 0.0
        %971 = vmatpush1.msra.mxu0 %v968
        %972 = vmatprep.subr.mxu0 0.0
        %973 = vmatpush1.msra.mxu0 0.0
        %974 = vmatprep.subr.mxu0 0.0
        %975 = vmatpush1.msra.mxu0 0.0
        %976 = vmatprep.subr.mxu0 0.0
        %977 = vmatpush1.msra.mxu0 0.0
        %978 = vmatprep.subr.mxu0 0.0
        %979 = vmatpush1.msra.mxu0 0.0
        %980 = vmatprep.subr.mxu0 0.0
        %981 = vmatpush1.msra.mxu0 0.0
        %982 = vmatprep.subr.mxu0 0.0
        %983 = vmatpush1.msra.mxu0 0.0
        %984 = vmatprep.subr.mxu0 0.0
        %985 = vmatpush1.msra.mxu0 0.0
        %986 = vmatprep.subr.mxu0 0.0
        %987 = vmatpush1.msra.mxu0 0.0
        %988 = vmatprep.subr.mxu0 0.0
        %989 = vmatpush1.msra.mxu0 0.0
        %990 = vmatprep.subr.mxu0 0.0
        %991 = vmatpush1.msra.mxu0 0.0
        %992 = vmatprep.subr.mxu0 0.0
        %993 = vmatpush1.msra.mxu0 0.0
        %994 = vmatprep.subr.mxu0 0.0
        %995 = vmatpush1.msra.mxu0 0.0
        %996 = vmatprep.subr.mxu0 0.0
        %997 = vmatpush1.msra.mxu0 0.0
        %998 = vmatprep.subr.mxu0 0.0
        %999 = vmatpush1.msra.mxu0 0.0
        %1000 = vmatprep.subr.mxu0 0.0
        %1001 = vmatpush1.msra.mxu0 0.0
        %1002 = vmatprep.subr.mxu0 0.0
        %1003 = vmatpush1.msra.mxu0 0.0
        %1004 = vmatprep.subr.mxu0 0.0
        %1005 = vmatpush1.msra.mxu0 0.0
        %1006 = vmatprep.subr.mxu0 0.0
        %1007 = vmatpush1.msra.mxu0 0.0
        %1008 = vmatprep.subr.mxu0 0.0
        %1009 = vmatpush1.msra.mxu0 0.0
        %1010 = vmatprep.subr.mxu0 0.0
        %1011 = vmatpush1.msra.mxu0 0.0
        %1012 = vmatprep.subr.mxu0 0.0
        %1013 = vmatpush1.msra.mxu0 0.0
        %1014 = vmatprep.subr.mxu0 0.0
        %1015 = vmatpush1.msra.mxu0 0.0
        %1016 = vmatprep.subr.mxu0 0.0
        %1017 = vmatpush1.msra.mxu0 0.0
        %1018 = vmatprep.subr.mxu0 0.0
        %1019 = vmatpush1.msra.mxu0 0.0
        %1020 = vmatprep.subr.mxu0 0.0
        %1021 = vmatpush1.msra.mxu0 0.0
        %1022 = vmatprep.subr.mxu0 0.0
        %1023 = vmatpush1.msra.mxu0 0.0
        %1024 = vmatprep.subr.mxu0 0.0
        %1025 = vmatpush1.msra.mxu0 0.0
        %1026 = vmatprep.subr.mxu0 0.0
        %1027 = vmatpush1.msra.mxu0 0.0
        %1028 = vmatprep.subr.mxu0 0.0
        %1029 = vmatpush1.msra.mxu0 0.0
        %1030 = vmatprep.subr.mxu0 0.0
        %1031 = vmatpush1.msra.mxu0 0.0
        %1032 = vmatprep.subr.mxu0 0.0
        %1033 = vmatpush1.msra.mxu0 0.0
        %1034 = vmatprep.mubr.f32.mxu0 0.0
        %1035 = vmatmul.mubr.f32.gmra.mrb[0].mxu0 %v962
        %v1036 = vpop.f32.mrb[0].mxu0
        %v1037 = vadd.f32 0.0, %v1036
        %v1038 = vpop.f32.mrb[0].mxu0
        %1039 = vmatprep.mubr.f32.mxu0 0.0
        %1040 = vmatmul.mubr.f32.gmra.mrb[0].mxu0 %v965
        %v1041 = vpop.f32.mrb[0].mxu0
        %v1042 = vadd.f32 0.0, %v1041
        %v1043 = vpop.f32.mrb[0].mxu0
        %1044 = vdwg.mxu0
        %v1045 = vadd.f32 %v794, %v1037
        %v1046 = vadd.f32 %v799, %v1042
        %v1047 = vmul.f32 %v1045, 0.33333334
        %v1048 = vmul.f32 %v1046, 0.33333334
        %1049 = vst.msk [vmem:[%s380] sm:$0xff] %vm407, %v1047
        %1050 = vst.msk [vmem:[%s380 + $0x8] sm:$0xff] %vm407, %v1048
        %s1051 = sand.u32 %s238, 1
        %s1052 = scalar_lea.sflag [#allocation4], %s1051
        %s1053 = sand.u32 %s238, 1
        %s1054 = smul.addr %s1053, 16
        %s1055 = scalar_lea.vmem [#allocation5], %s1054
        // Predicated region
        $region61: #{tpu_custom_call.1} parent=55 // pred_check
          %p1056 = pneg %p248
        $region62: #{tpu_custom_call.1} parent=55 // pred_check_branch
          %1058 = sbr.rel (%p1056) target = $region64
        $region63: #{tpu_custom_call.1} parent=55 // pred_region
          %s1060 = ssub.s32 256, 256
          %1061 = vsyncadd %s1052, %s1060
          %s1062 = smul.addr %s26, 2
          %s1063 = smul.addr %s1062, 128
          %s1064 = scalar_lea.hbm %s9, %s1063
          %s1065 = sshll.u32 %s1055, 4
          %s1066 = int_to_ptr.vmem [resolvable:$true] %s1065
          %1071 = dma.vmem_to_hbm [thread:$0]  %s1066, 256, %s1064, %s1052, 128, 128, 8
        $region64: #{tpu_custom_call.1} parent=55 // pred_fallthru
          _
      $region56: #{tpu_custom_call.1} parent=5 // pred_fallthru
        _
      %p1072 = scmp.le.s32.totalorder 2, %s21
      // Predicated region
      $region65: #{tpu_custom_call.1} parent=5 // pred_check
        %p1073 = pneg %p1072
      $region66: #{tpu_custom_call.1} parent=5 // pred_check_branch
        %1075 = sbr.rel (%p1073) target = $region68
      $region67: #{tpu_custom_call.1} parent=5 // pred_region
        %s1076 = ssub.s32 %s21, 2
        // Predicated region
        $region69: #{tpu_custom_call.1} parent=67 // pred_check
          %p1077 = pneg %p254
        $region70: #{tpu_custom_call.1} parent=67 // pred_check_branch
          %1079 = sbr.rel (%p1077) target = $region72
        $region71: #{tpu_custom_call.1} parent=67 // pred_region
          %s1080 = sand.u32 %s239, 1
          %s1081 = scalar_lea.sflag [#allocation4], %s1080
          %s1082 = sand.u32 %s239, 1
          %s1083 = smul.addr %s1082, 16
          %s1084 = scalar_lea.vmem [#allocation5], %s1083
          %1085 = dma.done %s1081, 256
        $region72: #{tpu_custom_call.1} parent=67 // pred_fallthru
          _
      $region68: #{tpu_custom_call.1} parent=5 // pred_fallthru
        _
    $region6: #{tpu_custom_call.1} parent=1 // loop_footer
      %s25 = sadd.s32 1, %s21
    $region7: #{tpu_custom_call.1} parent=1 // loop_footer_branch
      %20 = sbr.rel target = $region3
    $region8: #{tpu_custom_call.1} parent=1 // loop_exit
      _
    %1086 = vsyncpa [#allocation3], 1
    %s1087 = scalar_lea.sflag [#allocation3], 1
    %1088 = vsyncpa %s1087, 1
    %1089 = vsyncpa [#allocation4], 1
    %s1090 = scalar_lea.sflag [#allocation4], 1
    %1091 = vsyncpa %s1090, 1

</llo_original>
